<compile_context>
chip_gen: v7x
topology: tpu7x:2x2x1
jax: 0.10.0
libtpu: 0.0.40
codegen_flags: <defaults>
</compile_context>

<pallas_src>
import functools
import numpy as np
import jax
import jax.numpy as jnp
from jax import lax
from jax.experimental import pallas as pl
from jax.experimental.pallas import tpu as pltpu

NEG = -1e30      # finite stand-in for -inf (avoids -inf - -inf = nan)
SUB = 8          # utterances per program == vreg sublane count
UNROLL = 4       # manual unroll factor of the time recursion


@functools.lru_cache(maxsize=None)
def _roll_shifts(lanes):
    """Pin pltpu.roll's rotation convention with a tiny probe kernel so the
    alpha[s-1] / alpha[s-2] lane shifts are direction-proof."""
    def probe(x_ref, o_ref):
        o_ref[...] = pltpu.roll(x_ref[...], 1, axis=1)

    x = lax.broadcasted_iota(jnp.float32, (8, 128), 1)
    out = pl.pallas_call(
        probe, out_shape=jax.ShapeDtypeStruct((8, 128), jnp.float32))(x)
    fwd = bool(jax.device_get(out[0, 1]) == 0.0)     # out[l] == in[l-1] ?
    return (1, 2) if fwd else (lanes - 1, lanes - 2)


def _ctc_kernel(flen_sm, feat_ref, ext_ref, flen_ref, tlen_ref, out_ref,
                *em_refs, T, V, Lpad, blank_idx, shift1, shift2):
    g = pl.program_id(0)
    base = g * SUB

    # -------- phase 1: log-softmax + one-hot emission gather (MXU) ----------
    # em[s][t, l] = log_softmax(feature[s, t, :])[ext[s, l]]
    #             = (x @ onehot)[t, l] - lse[t]     (lse fused; no (T,V) temp)
    vidx = lax.broadcasted_iota(jnp.int32, (V, Lpad), 0)
    for s in range(SUB):
        xs = feat_ref[s]                                        # (T, V) f32
        m = jnp.max(xs, axis=-1, keepdims=True)
        lse = m + jnp.log(jnp.sum(jnp.exp(xs - m), axis=-1, keepdims=True))
        ext_row = ext_ref[pl.ds(s, 1), :]                       # (1, Lpad)
        onehot = (vidx == ext_row).astype(jnp.float32)          # (V, Lpad)
        em_refs[s][...] = (
            jnp.dot(xs, onehot, preferred_element_type=jnp.float32) - lse)

    # -------- hoisted masks & per-sample vectors ----------------------------
    ext2d = ext_ref[...]                                        # (SUB, Lpad)
    sidx = lax.broadcasted_iota(jnp.int32, (SUB, Lpad), 1)
    ext_m2 = pltpu.roll(ext2d, shift2, axis=1)                  # ext[s, l-2]
    skip_ok = (ext2d != blank_idx) & (ext2d != ext_m2) & (sidx >= 2)
    mask1 = sidx >= 1
    flen_v = flen_ref[...]                                      # (SUB, 1) i32
    tlen_v = tlen_ref[...]                                      # (SUB, 1) i32
    Lb = 2 * tlen_v + 1                                         # valid ext len

    def load_em(t):        # row t of every sample -> dense (SUB, Lpad) tile
        return jnp.concatenate(
            [em_refs[s][pl.ds(t, 1), :] for s in range(SUB)], axis=0)

    alpha0 = jnp.where(sidx < jnp.minimum(Lb, 2), load_em(0), NEG)

    # -------- phase 2: forward (alpha) recursion, 8 samples per vreg --------
    mf = flen_sm[base]
    for s in range(1, SUB):
        mf = jnp.maximum(mf, flen_sm[base + s])
    mf = jnp.minimum(mf, T)                    # longest utterance this block
    n_chunks = (mf - 1 + (UNROLL - 1)) // UNROLL

    def chunk(c, alpha):
        t0 = 1 + c * UNROLL
        for u in range(UNROLL):                # manual unroll
            t = t0 + u
            em_t = load_em(jnp.minimum(t, T - 1))
            a1 = jnp.where(mask1, pltpu.roll(alpha, shift1, axis=1), NEG)
            a2 = jnp.where(skip_ok, pltpu.roll(alpha, shift2, axis=1), NEG)
            mx = jnp.maximum(jnp.maximum(alpha, a1), a2)
            ssum = jnp.exp(alpha - mx) + jnp.exp(a1 - mx) + jnp.exp(a2 - mx)
            new_alpha = mx + jnp.log(ssum) + em_t
            alpha = jnp.where(t < flen_v, new_alpha, alpha)     # padded frames
        return alpha

    alpha = lax.fori_loop(0, n_chunks, chunk, alpha0)

    # -------- readout: -logsumexp of the two final extended states ----------
    a_last = jnp.max(jnp.where(sidx == Lb - 1, alpha, NEG), axis=1,
                     keepdims=True)
    a_prev = jnp.max(jnp.where(sidx == Lb - 2, alpha, NEG), axis=1,
                     keepdims=True)
    m2 = jnp.maximum(a_last, a_prev)
    nll = -(m2 + jnp.log(jnp.exp(a_last - m2) + jnp.exp(a_prev - m2)))
    loss = nll / jnp.maximum(tlen_v, 1).astype(jnp.float32)     # (SUB, 1)
    out_ref[...] = jnp.broadcast_to(loss, (SUB, 128))


def ctc_loss_pallas(feature, targets, feature_lengths, target_lengths,
                    blank_idx=0):
    """feature (B,T,V) f32, targets (B,S) int, lengths (B,) int -> scalar."""
    feature = feature.astype(jnp.float32)
    B, T, V = feature.shape
    S = targets.shape[1]
    Lpad = ((2 * S + 1 + 127) // 128) * 128    # lane-aligned extended labels
    Bpad = ((B + SUB - 1) // SUB) * SUB

    flen = feature_lengths.astype(jnp.int32)
    tlen = target_lengths.astype(jnp.int32)

    # Extended target sequence [blank, t0, blank, t1, ..., blank], lane-padded
    # with blanks (pad lanes never reach the readout positions).
    ext = jnp.full((B, Lpad), blank_idx, jnp.int32)
    ext = ext.at[:, 1:2 * S:2].set(targets.astype(jnp.int32))

    if Bpad != B:                               # pad batch to a multiple of 8
        p = Bpad - B
        feature = jnp.pad(feature, ((0, p), (0, 0), (0, 0)))
        ext = jnp.pad(ext, ((0, p), (0, 0)), constant_values=blank_idx)
        flen = jnp.pad(flen, (0, p), constant_values=1)
        tlen = jnp.pad(tlen, (0, p), constant_values=0)

    shift1, shift2 = _roll_shifts(Lpad)
    kernel = functools.partial(_ctc_kernel, T=T, V=V, Lpad=Lpad,
                               blank_idx=blank_idx, shift1=shift1,
                               shift2=shift2)

    out = pl.pallas_call(
        kernel,
        out_shape=jax.ShapeDtypeStruct((Bpad, 128), jnp.float32),
        grid_spec=pltpu.PrefetchScalarGridSpec(
            num_scalar_prefetch=1,              # flen -> SMEM (loop bound)
            grid=(Bpad // SUB,),
            in_specs=[
                pl.BlockSpec((SUB, T, V), lambda g, fl: (g, 0, 0)),
                pl.BlockSpec((SUB, Lpad), lambda g, fl: (g, 0)),
                pl.BlockSpec((SUB, 1), lambda g, fl: (g, 0)),
                pl.BlockSpec((SUB, 1), lambda g, fl: (g, 0)),
            ],
            out_specs=pl.BlockSpec((SUB, 128), lambda g, fl: (g, 0)),
            # TODO(synk): for very long T / large V, T-tile phase 1 with
            # pltpu.emit_pipeline to keep the per-program VMEM footprint flat.
            scratch_shapes=[pltpu.VMEM((T, Lpad), jnp.float32)
                            for _ in range(SUB)],
        ),
        compiler_params=pltpu.CompilerParams(
            dimension_semantics=("parallel",),  # v7x: shard batch over 2 TCs
            vmem_limit_bytes=64 * 1024 * 1024),
    )(flen, feature, ext, flen[:, None], tlen[:, None])

    return jnp.mean(out[:B, 0])                 # reduction='mean' over batch


# ---------------- pure-NumPy reference (for validation only) ----------------
def _lse(vals):
    m = max(vals)
    if m == -np.inf:
        return -np.inf
    return m + np.log(sum(np.exp(v - m) for v in vals))


def ctc_loss_ref(feature, targets, flen, tlen, blank=0):
    feature = np.asarray(feature, np.float64)
    targets = np.asarray(targets)
    B, _, _ = feature.shape
    losses = []
    for b in range(B):
        Tb, Sb = int(flen[b]), int(tlen[b])
        x = feature[b, :Tb]
        mrow = x.max(-1, keepdims=True)
        lp = x - (mrow + np.log(np.exp(x - mrow).sum(-1, keepdims=True)))
        ext = [blank]
        for c in targets[b, :Sb].tolist():
            ext += [int(c), blank]
        Lb = len(ext)
        alpha = np.full(Lb, -np.inf)
        alpha[0] = lp[0, ext[0]]
        if Lb > 1:
            alpha[1] = lp[0, ext[1]]
        for t in range(1, Tb):
            new = np.empty(Lb)
            for s in range(Lb):
                vals = [alpha[s]]
                if s >= 1:
                    vals.append(alpha[s - 1])
                if s >= 2 and ext[s] != blank and ext[s] != ext[s - 2]:
                    vals.append(alpha[s - 2])
                new[s] = _lse(vals) + lp[t, ext[s]]
            alpha = new
        nll = -_lse([alpha[Lb - 1], alpha[Lb - 2]]) if Lb > 1 else -alpha[0]
        losses.append(nll / max(Sb, 1))
    return float(np.mean(losses))


if __name__ == "__main__":
    key = jax.random.PRNGKey(0)
    B, T, V, S = 2, 16, 32, 6
    k1, k2 = jax.random.split(key)
    feature = jax.random.normal(k1, (B, T, V), jnp.float32)
    targets = jax.random.randint(k2, (B, S), 1, V)    # labels in [1, V-1]
    feature_lengths = jnp.array([16, 12], jnp.int32)
    target_lengths = jnp.array([6, 4], jnp.int32)

    loss = ctc_loss_pallas(feature, targets, feature_lengths, target_lengths)
    loss = jax.block_until_ready(loss)

    ref = ctc_loss_ref(np.array(feature), np.array(targets),
                       np.array(feature_lengths), np.array(target_lengths))
    assert abs(float(loss) - ref) < 1e-3 * max(1.0, abs(ref)), (float(loss), ref)
    print("KERNEL_OK")
</pallas_src>

<mosaic_0001>
module attributes {stable_mosaic.version = 11 : i64} {
  func.func @probe(%arg0: memref<8x128xf32, #tpu.memory_space<vmem>>, %arg1: memref<8x128xf32, #tpu.memory_space<vmem>>) attributes {dimension_semantics = [], scalar_prefetch = 0 : i64, scratch_operands = 0 : i64, tpu.core_type = #tpu.core_type<tc>} {
    %c0 = arith.constant 0 : index
    %c0_0 = arith.constant 0 : index
    %0 = vector.load %arg0[%c0, %c0_0] : memref<8x128xf32, #tpu.memory_space<vmem>>, vector<8x128xf32>
    %c1_i32 = arith.constant 1 : i32
    %1 = tpu.dynamic_rotate %0 by %c1_i32 dim 1 : vector<8x128xf32>, i32 -> vector<8x128xf32>
    %c0_1 = arith.constant 0 : index
    %c0_2 = arith.constant 0 : index
    %2 = vector.load %arg1[%c0_1, %c0_2] : memref<8x128xf32, #tpu.memory_space<vmem>>, vector<8x128xf32>
    tpu.vector_store %arg1[%c0_1, %c0_2], %1 {strides = array<i32>} : memref<8x128xf32, #tpu.memory_space<vmem>>, vector<8x128xf32>,
    return
  }
}

</mosaic_0001>

<llo_original>
// kernel: tpu_custom_call.1
$region0: #{tpu_custom_call.1}
  #allocation0 [shape = 'u32[]', space=smem, size = 0x4, offset = 0x4, fixed_abs, tag = 'smem constant byte address 0x4 - core index']
  #allocation1 [shape = 'u32[144,128]{1,0:T(1,128)}', space=vmem, size = 0x12000, scoped, tag = 'internal scratch']
  %s0 = inlined_call_operand.hbm [shape: f32[8,128], index: 0, kind: input, shape index: {}]
  %s1 = inlined_call_operand.hbm [shape: f32[8,128], index: 1, kind: output, shape index: {}]
  %s2 = sld [smem:[#allocation0]]
  $region18: #{tpu_custom_call.1} parent=0
    _
  %s4 = ssub.s32 1, %s2
  %s5 = scalar_select 0, %s4, %s2
  $region1: #{tpu_custom_call.1} parent=0
    #allocation2 [shape = 'u8[4096]{0}', space=vmem, size = 0x1000, scoped, tag = 'input window, operand 0, single buffered']
    #allocation3 [shape = 's32[1]{0}', space=sflag, size = 0x4, scoped, tag = 'scoped memory for tpu_custom_call.1']
    #allocation4 [shape = 's32[1]{0}', space=sflag, size = 0x4, scoped, tag = 'scoped memory for tpu_custom_call.1']
    #allocation5 [shape = 'u8[4096]{0}', space=vmem, size = 0x1000, scoped, tag = 'output window, operand 0, single buffered']
    %6 = vsyncpa [#allocation3], 0
    %7 = vsyncpa [#allocation4], 0
    // Predicated region
    $region2: #{tpu_custom_call.1} parent=1 // pred_check
      _
    $region3: #{tpu_custom_call.1} parent=1 // pred_check_branch
      %9 = sbr.rel (0) target = $region5
    $region4: #{tpu_custom_call.1} parent=1 // pred_region
      %s11 = ssub.s32 128, 128
      %12 = vsyncadd [#allocation3], %s11
      %s14 = sshll.u32 [#allocation2], 4
      %s15 = int_to_ptr.vmem [resolvable:$true] %s14
      %17 = dma.hbm_to_vmem [thread:$0]  %s0, 128, %s15, [#allocation3]
    $region5: #{tpu_custom_call.1} parent=1 // pred_fallthru
      _
    // Predicated region
    $region6: #{tpu_custom_call.1} parent=1 // pred_check
      _
    $region7: #{tpu_custom_call.1} parent=1 // pred_check_branch
      %19 = sbr.rel (0) target = $region9
    $region8: #{tpu_custom_call.1} parent=1 // pred_region
      %20 = dma.done [#allocation3], 128
    $region9: #{tpu_custom_call.1} parent=1 // pred_fallthru
      _
    %v21 = vld [vmem:[#allocation2] sm:$0xff]
    %22 = vrot.lane.b32.xlu0 %v21, 1
    %v23 = vpop.permute.xlu0 %22
    %24 = vst [vmem:[#allocation5] sm:$0xff] %v23
    // Predicated region
    $region10: #{tpu_custom_call.1} parent=1 // pred_check
      _
    $region11: #{tpu_custom_call.1} parent=1 // pred_check_branch
      %26 = sbr.rel (0) target = $region13
    $region12: #{tpu_custom_call.1} parent=1 // pred_region
      %s28 = ssub.s32 128, 128
      %29 = vsyncadd [#allocation4], %s28
      %s31 = sshll.u32 [#allocation5], 4
      %s32 = int_to_ptr.vmem [resolvable:$true] %s31
      %34 = dma.vmem_to_hbm [thread:$0]  %s32, 128, %s1, [#allocation4]
    $region13: #{tpu_custom_call.1} parent=1 // pred_fallthru
      _
    // Predicated region
    $region14: #{tpu_custom_call.1} parent=1 // pred_check
      _
    $region15: #{tpu_custom_call.1} parent=1 // pred_check_branch
      %36 = sbr.rel (0) target = $region17
    $region16: #{tpu_custom_call.1} parent=1 // pred_region
      %37 = dma.done [#allocation4], 128
    $region17: #{tpu_custom_call.1} parent=1 // pred_fallthru
      _
    %38 = vsyncpa [#allocation3], 1
    %39 = vsyncpa [#allocation4], 1

</llo_original>
